<compile_context>
chip_gen: v7x
topology: tpu7x:2x2x1
jax: 0.10.0
libtpu: 0.0.40
codegen_flags: <defaults>
</compile_context>

<pallas_src>
import functools

import jax
import jax.numpy as jnp
from jax.experimental import pallas as pl
from jax.experimental.pallas import tpu as pltpu


# --------------------------------------------------------------------------- #
# Kernels
# --------------------------------------------------------------------------- #
def _adain_fused_kernel(x_ref, w_ref, b_ref, o_ref, *, eps, inv_hw):
    """Single-pass path: the whole (tile_bc, HW) row block is resident in VMEM."""
    x = x_ref[...].astype(jnp.float32)
    mean = jnp.sum(x, axis=-1, keepdims=True) * inv_hw
    # Centered variance over the VMEM-resident tile: avoids the catastrophic
    # cancellation of E[x^2] - mean^2 and is free in an HBM-bound kernel.
    d = x - mean
    var = jnp.sum(d * d, axis=-1, keepdims=True) * inv_hw
    inv_std = jax.lax.rsqrt(var + eps)                       # EUP
    scale = inv_std * w_ref[...]
    shift = b_ref[...] - mean * scale
    # FMA epilogue; re-read x_ref so the f32 upcast is not kept live across
    # the reduction and the epilogue (frees VMEM headroom for bf16/int8 tiles).
    o_ref[...] = (x_ref[...].astype(jnp.float32) * scale + shift).astype(o_ref.dtype)


def _adain_stats_kernel(x_ref, w_ref, b_ref, scale_ref, shift_ref,
                        sum_ref, sq_ref, *, eps, inv_hw, hw, hw_chunk, mask_tail):
    """Chunked-HW path, phase 1: per-row sum / sum-of-squares -> scale/shift."""
    k = pl.program_id(1)

    @pl.when(k == 0)
    def _():
        sum_ref[...] = jnp.zeros_like(sum_ref)
        sq_ref[...] = jnp.zeros_like(sq_ref)

    x = x_ref[...].astype(jnp.float32)
    if mask_tail:
        # Last HW chunk runs past the true row; zero the out-of-bounds lanes
        # (divisor uses the true HW, so statistics stay exact).
        col = jax.lax.broadcasted_iota(jnp.int32, x.shape, 1) + k * hw_chunk
        x = jnp.where(col < hw, x, 0.0)
    sum_ref[...] += jnp.sum(x, axis=-1, keepdims=True)
    sq_ref[...] += jnp.sum(x * x, axis=-1, keepdims=True)

    @pl.when(k == pl.num_programs(1) - 1)
    def _():
        mean = sum_ref[...] * inv_hw
        var = jnp.maximum(sq_ref[...] * inv_hw - mean * mean, 0.0)  # f32 accum
        scale = jax.lax.rsqrt(var + eps) * w_ref[...]
        scale_ref[...] = scale
        shift_ref[...] = b_ref[...] - mean * scale


def _adain_apply_kernel(x_ref, scale_ref, shift_ref, o_ref):
    """Chunked-HW path, phase 2: out = x * scale + shift (streaming FMA)."""
    o_ref[...] = (x_ref[...].astype(jnp.float32) * scale_ref[...]
                  + shift_ref[...]).astype(o_ref.dtype)


# --------------------------------------------------------------------------- #
# Tiling helpers
# --------------------------------------------------------------------------- #
def _pick_bc_tile(bc, row_bytes, sublane, target_bytes):
    """Rows per block: ~target_bytes blocks, sublane-aligned; prefer an even
    number of grid steps (v7x shards the 'parallel' axis over 2 TensorCores)."""
    rows = max(1, target_bytes // max(row_bytes, 1))
    tile = max(sublane, (rows // sublane) * sublane)
    if tile >= bc:
        return bc                                   # single full-extent block
    steps = pl.cdiv(bc, tile)
    if steps > 1 and steps % 2 == 1:
        alt = max(sublane, pl.cdiv(pl.cdiv(bc, steps + 1), sublane) * sublane)
        if pl.cdiv(bc, alt) % 2 == 0:
            tile = alt
    return tile


def _vmem_limit_bytes(block_bytes):
    # Double-buffered pipeline blocks + headroom; keep under v7x's 64 MiB
    # physical VMEM while staying at/above the common scoped defaults.
    need = 2 * block_bytes + 2 * 1024 * 1024
    return int(min(max(need, 32 * 1024 * 1024), 48 * 1024 * 1024))


# --------------------------------------------------------------------------- #
# Wrapper
# --------------------------------------------------------------------------- #
def adaptive_instance_norm_2d(x, weight, bias, *, eps=1e-5,
                              target_block_bytes=4 * 1024 * 1024,
                              max_single_block_bytes=8 * 1024 * 1024):
    """x: (B, C, H, W); weight, bias: (B*C,). Returns (B, C, H, W)."""
    B, C, H, W = x.shape
    BC, HW = B * C, H * W
    assert weight.shape == (BC,) and bias.shape == (BC,)

    itemsize = jnp.dtype(x.dtype).itemsize
    sublane = {4: 8, 2: 16, 1: 32}.get(itemsize, 8)
    row_bytes = HW * itemsize

    x2d = x.reshape(BC, HW)                    # free reshape; HW on the lane axis
    w2d = weight.astype(jnp.float32).reshape(BC, 1)
    b2d = bias.astype(jnp.float32).reshape(BC, 1)

    min_rows = min(BC, sublane)                # smallest legal row block

    if min_rows * row_bytes <= max_single_block_bytes:
        # -------------------- fused single-pass path --------------------
        tile_bc = _pick_bc_tile(BC, row_bytes, sublane, target_block_bytes)
        grid = (pl.cdiv(BC, tile_bc),)
        block_bytes = 2 * tile_bc * row_bytes          # x block + out block
        cost = pl.CostEstimate(
            flops=7 * BC * HW,
            transcendentals=BC,
            bytes_accessed=2 * BC * HW * itemsize + 2 * BC * 4,
        )
        out2d = pl.pallas_call(
            functools.partial(_adain_fused_kernel, eps=float(eps),
                              inv_hw=1.0 / float(HW)),
            out_shape=jax.ShapeDtypeStruct((BC, HW), x.dtype),
            grid_spec=pltpu.PrefetchScalarGridSpec(
                num_scalar_prefetch=0,
                grid=grid,
                in_specs=[
                    pl.BlockSpec((tile_bc, HW), lambda i: (i, 0)),
                    pl.BlockSpec((tile_bc, 1), lambda i: (i, 0)),
                    pl.BlockSpec((tile_bc, 1), lambda i: (i, 0)),
                ],
                out_specs=pl.BlockSpec((tile_bc, HW), lambda i: (i, 0)),
            ),
            compiler_params=pltpu.CompilerParams(
                dimension_semantics=("parallel",),
                vmem_limit_bytes=_vmem_limit_bytes(block_bytes),
            ),
            cost_estimate=cost,
        )(x2d, w2d, b2d)
        return out2d.reshape(B, C, H, W)

    # -------------- chunked-HW two-phase path (large images) --------------
    tile_bc = min_rows
    budget = min(target_block_bytes, max_single_block_bytes)
    hw_chunk = max(128, (budget // (tile_bc * itemsize)) // 128 * 128)
    n_bc = pl.cdiv(BC, tile_bc)
    n_hw = pl.cdiv(HW, hw_chunk)
    mask_tail = (HW % hw_chunk) != 0
    block_bytes = tile_bc * hw_chunk * itemsize

    stats_cost = pl.CostEstimate(
        flops=3 * BC * HW,
        transcendentals=BC,
        bytes_accessed=BC * HW * itemsize + 4 * BC * 4,
    )
    scale2d, shift2d = pl.pallas_call(
        functools.partial(_adain_stats_kernel, eps=float(eps),
                          inv_hw=1.0 / float(HW), hw=HW, hw_chunk=hw_chunk,
                          mask_tail=mask_tail),
        out_shape=(jax.ShapeDtypeStruct((BC, 1), jnp.float32),
                   jax.ShapeDtypeStruct((BC, 1), jnp.float32)),
        grid_spec=pltpu.PrefetchScalarGridSpec(
            num_scalar_prefetch=0,
            grid=(n_bc, n_hw),
            in_specs=[
                pl.BlockSpec((tile_bc, hw_chunk), lambda i, k: (i, k)),
                pl.BlockSpec((tile_bc, 1), lambda i, k: (i, 0)),
                pl.BlockSpec((tile_bc, 1), lambda i, k: (i, 0)),
            ],
            out_specs=(
                pl.BlockSpec((tile_bc, 1), lambda i, k: (i, 0)),
                pl.BlockSpec((tile_bc, 1), lambda i, k: (i, 0)),
            ),
            scratch_shapes=[pltpu.VMEM((tile_bc, 1), jnp.float32),
                            pltpu.VMEM((tile_bc, 1), jnp.float32)],
        ),
        compiler_params=pltpu.CompilerParams(
            dimension_semantics=("parallel", "arbitrary"),
            vmem_limit_bytes=_vmem_limit_bytes(block_bytes),
        ),
        cost_estimate=stats_cost,
    )(x2d, w2d, b2d)

    apply_cost = pl.CostEstimate(
        flops=2 * BC * HW,
        transcendentals=0,
        bytes_accessed=2 * BC * HW * itemsize + 2 * BC * 4,
    )
    out2d = pl.pallas_call(
        _adain_apply_kernel,
        out_shape=jax.ShapeDtypeStruct((BC, HW), x.dtype),
        grid_spec=pltpu.PrefetchScalarGridSpec(
            num_scalar_prefetch=0,
            grid=(n_bc, n_hw),
            in_specs=[
                pl.BlockSpec((tile_bc, hw_chunk), lambda i, k: (i, k)),
                pl.BlockSpec((tile_bc, 1), lambda i, k: (i, 0)),
                pl.BlockSpec((tile_bc, 1), lambda i, k: (i, 0)),
            ],
            out_specs=pl.BlockSpec((tile_bc, hw_chunk), lambda i, k: (i, k)),
        ),
        compiler_params=pltpu.CompilerParams(
            dimension_semantics=("parallel", "parallel"),
            vmem_limit_bytes=_vmem_limit_bytes(2 * block_bytes),
        ),
        cost_estimate=apply_cost,
    )(x2d, scale2d, shift2d)
    return out2d.reshape(B, C, H, W)


# --------------------------------------------------------------------------- #
# Pure-JAX reference (mirrors F.batch_norm on the (1, B*C, H, W) view)
# --------------------------------------------------------------------------- #
def _reference(x, weight, bias, eps=1e-5):
    B, C, H, W = x.shape
    xr = x.reshape(B * C, H * W).astype(jnp.float32)
    mean = xr.mean(axis=-1, keepdims=True)
    var = ((xr - mean) ** 2).mean(axis=-1, keepdims=True)     # biased variance
    out = (xr - mean) / jnp.sqrt(var + eps)
    out = out * weight[:, None] + bias[:, None]
    return out.reshape(B, C, H, W).astype(x.dtype)


if __name__ == "__main__":
    key = jax.random.PRNGKey(0)
    k1, k2, k3, k4, k5 = jax.random.split(key, 5)

    # AdaIN weight/bias are assigned externally in the PyTorch usage pattern
    # (shape (B*C,)); initialize deterministically here.
    B, C, H, W = 2, 4, 16, 16
    weight = jax.random.normal(k2, (B * C,), dtype=jnp.float32) * 0.5 + 1.0
    bias = jax.random.normal(k3, (B * C,), dtype=jnp.float32) * 0.1

    # 1) Aligned shape -> fused single-pass path.
    x = jax.random.normal(k1, (B, C, H, W), dtype=jnp.float32)
    out = jax.block_until_ready(adaptive_instance_norm_2d(x, weight, bias, eps=1e-5))
    assert out.shape == (B, C, H, W)
    assert jnp.max(jnp.abs(out - _reference(x, weight, bias))) < 1e-4

    # 2) Non-128-aligned H*W -> fused path with a full-extent (unpadded) HW block.
    B, C, H, W = 2, 4, 10, 12
    x = jax.random.normal(k4, (B, C, H, W), dtype=jnp.float32)
    out = jax.block_until_ready(adaptive_instance_norm_2d(x, weight, bias, eps=1e-5))
    assert jnp.max(jnp.abs(out - _reference(x, weight, bias))) < 1e-4

    # 3) Force the chunked-HW two-phase path (including the masked ragged tail).
    B, C, H, W = 2, 4, 30, 40            # HW = 1200, not a multiple of 128
    x = jax.random.normal(k5, (B, C, H, W), dtype=jnp.float32)
    out = jax.block_until_ready(
        adaptive_instance_norm_2d(x, weight, bias, eps=1e-5,
                                  max_single_block_bytes=16 * 1024))
    assert jnp.max(jnp.abs(out - _reference(x, weight, bias))) < 1e-4

    # TODO(synk): running_mean / running_var momentum updates are training-only
    # buffer side effects and do not affect this forward output; not implemented.
    print("KERNEL_OK")
</pallas_src>

<mosaic_0001>
module attributes {stable_mosaic.version = 11 : i64} {
  func.func @_adain_fused_kernel(%arg0: i32, %arg1: memref<8x256xf32, #tpu.memory_space<vmem>>, %arg2: memref<8x1xf32, #tpu.memory_space<vmem>>, %arg3: memref<8x1xf32, #tpu.memory_space<vmem>>, %arg4: memref<8x256xf32, #tpu.memory_space<vmem>>) attributes {dimension_semantics = [#tpu.dimension_semantics<parallel>], iteration_bounds = array<i64: 1>, scalar_prefetch = 0 : i64, scratch_operands = 0 : i64, tpu.core_type = #tpu.core_type<tc>, window_params = [{transform_indices = @transform_0, window_bounds = array<i64: 8, 256>}, {transform_indices = @transform_1, window_bounds = array<i64: 8, 1>}, {transform_indices = @transform_2, window_bounds = array<i64: 8, 1>}, {transform_indices = @transform_3, window_bounds = array<i64: 8, 256>}]} {
    %c0 = arith.constant 0 : index
    %c0_0 = arith.constant 0 : index
    %0 = vector.load %arg1[%c0, %c0_0] : memref<8x256xf32, #tpu.memory_space<vmem>>, vector<8x256xf32>
    %cst = arith.constant dense<0.000000e+00> : vector<8xf32>
    %1 = vector.multi_reduction <add>, %0, %cst [1] : vector<8x256xf32> to vector<8xf32>
    %2 = vector.shape_cast %1 : vector<8xf32> to vector<8x1xf32>
    %cst_1 = arith.constant 3.906250e-03 : f32
    %3 = vector.broadcast %cst_1 : f32 to vector<8x1xf32>
    %4 = arith.mulf %2, %3 : vector<8x1xf32>
    %5 = vector.broadcast %4 : vector<8x1xf32> to vector<8x256xf32>
    %6 = arith.subf %0, %5 : vector<8x256xf32>
    %7 = arith.mulf %6, %6 : vector<8x256xf32>
    %cst_2 = arith.constant dense<0.000000e+00> : vector<8xf32>
    %8 = vector.multi_reduction <add>, %7, %cst_2 [1] : vector<8x256xf32> to vector<8xf32>
    %9 = vector.shape_cast %8 : vector<8xf32> to vector<8x1xf32>
    %cst_3 = arith.constant 3.906250e-03 : f32
    %10 = vector.broadcast %cst_3 : f32 to vector<8x1xf32>
    %11 = arith.mulf %9, %10 : vector<8x1xf32>
    %cst_4 = arith.constant 9.99999974E-6 : f32
    %12 = vector.broadcast %cst_4 : f32 to vector<8x1xf32>
    %13 = arith.addf %11, %12 : vector<8x1xf32>
    %14 = math.rsqrt %13 : vector<8x1xf32>
    %c0_5 = arith.constant 0 : index
    %c0_6 = arith.constant 0 : index
    %15 = vector.load %arg2[%c0_5, %c0_6] : memref<8x1xf32, #tpu.memory_space<vmem>>, vector<8x1xf32>
    %16 = arith.mulf %14, %15 : vector<8x1xf32>
    %c0_7 = arith.constant 0 : index
    %c0_8 = arith.constant 0 : index
    %17 = vector.load %arg3[%c0_7, %c0_8] : memref<8x1xf32, #tpu.memory_space<vmem>>, vector<8x1xf32>
    %18 = arith.mulf %4, %16 : vector<8x1xf32>
    %19 = arith.subf %17, %18 : vector<8x1xf32>
    %c0_9 = arith.constant 0 : index
    %c0_10 = arith.constant 0 : index
    %20 = vector.load %arg1[%c0_9, %c0_10] : memref<8x256xf32, #tpu.memory_space<vmem>>, vector<8x256xf32>
    %21 = vector.broadcast %16 : vector<8x1xf32> to vector<8x256xf32>
    %22 = arith.mulf %20, %21 : vector<8x256xf32>
    %23 = vector.broadcast %19 : vector<8x1xf32> to vector<8x256xf32>
    %24 = arith.addf %22, %23 : vector<8x256xf32>
    %c0_11 = arith.constant 0 : index
    %c0_12 = arith.constant 0 : index
    %25 = vector.load %arg4[%c0_11, %c0_12] : memref<8x256xf32, #tpu.memory_space<vmem>>, vector<8x256xf32>
    tpu.vector_store %arg4[%c0_11, %c0_12], %24 {strides = array<i32>} : memref<8x256xf32, #tpu.memory_space<vmem>>, vector<8x256xf32>,
    return
  }
  func.func @transform_0(%arg0: i32) -> (i32, i32) {
    %c0_i32 = arith.constant 0 : i32
    %c0_i32_0 = arith.constant 0 : i32
    return %arg0, %c0_i32 : i32, i32
  }
  func.func @transform_1(%arg0: i32) -> (i32, i32) {
    %c0_i32 = arith.constant 0 : i32
    %c0_i32_0 = arith.constant 0 : i32
    return %arg0, %c0_i32 : i32, i32
  }
  func.func @transform_2(%arg0: i32) -> (i32, i32) {
    %c0_i32 = arith.constant 0 : i32
    %c0_i32_0 = arith.constant 0 : i32
    return %arg0, %c0_i32 : i32, i32
  }
  func.func @transform_3(%arg0: i32) -> (i32, i32) {
    %c0_i32 = arith.constant 0 : i32
    %c0_i32_0 = arith.constant 0 : i32
    return %arg0, %c0_i32 : i32, i32
  }
}

</mosaic_0001>

<llo_original>
// kernel: tpu_custom_call.1
$region0: #{tpu_custom_call.1}
  #allocation0 [shape = 'u32[]', space=smem, size = 0x4, offset = 0x4, fixed_abs, tag = 'smem constant byte address 0x4 - core index']
  #allocation1 [shape = 'u32[144,128]{1,0:T(1,128)}', space=vmem, size = 0x12000, scoped, tag = 'internal scratch']
  %s0 = inlined_call_operand.vmem [shape: f32[8,256], index: 0, kind: input, shape index: {}]
  %s1 = inlined_call_operand.vmem [shape: f32[8,1], index: 1, kind: input, shape index: {}]
  %s2 = inlined_call_operand.vmem [shape: f32[8,1], index: 2, kind: input, shape index: {}]
  %s3 = inlined_call_operand.hbm [shape: f32[8,256], index: 3, kind: output, shape index: {}]
  %s4 = sld [smem:[#allocation0]]
  $region22: #{tpu_custom_call.1} parent=0
    _
  %s6 = ssub.s32 1, %s4
  %s7 = scalar_select 0, %s6, %s4
  $region1: #{tpu_custom_call.1} parent=0
    #allocation2 [shape = 'u8[8192]{0}', space=vmem, size = 0x2000, scoped, tag = 'output window, operand 0, single buffered']
    #allocation3 [shape = 's32[1]{0}', space=sflag, size = 0x4, scoped, tag = 'scoped memory for tpu_custom_call.1']
    %8 = vsyncpa [#allocation3], 0
    // Predicated region
    $region2: #{tpu_custom_call.1} parent=1 // pred_check
      _
    $region3: #{tpu_custom_call.1} parent=1 // pred_check_branch
      %10 = sbr.rel (0) target = $region5
    $region4: #{tpu_custom_call.1} parent=1 // pred_region
      _
    $region5: #{tpu_custom_call.1} parent=1 // pred_fallthru
      _
    // Predicated region
    $region6: #{tpu_custom_call.1} parent=1 // pred_check
      _
    $region7: #{tpu_custom_call.1} parent=1 // pred_check_branch
      %12 = sbr.rel (0) target = $region9
    $region8: #{tpu_custom_call.1} parent=1 // pred_region
      _
    $region9: #{tpu_custom_call.1} parent=1 // pred_fallthru
      _
    // Predicated region
    $region10: #{tpu_custom_call.1} parent=1 // pred_check
      _
    $region11: #{tpu_custom_call.1} parent=1 // pred_check_branch
      %14 = sbr.rel (0) target = $region13
    $region12: #{tpu_custom_call.1} parent=1 // pred_region
      _
    $region13: #{tpu_custom_call.1} parent=1 // pred_fallthru
      _
    %v15 = vld [vmem:[%s0] sm:$0xff]
    %v16 = vld [vmem:[%s0 + $0x8] sm:$0xff]
    %v17 = vadd.f32 %v15, %v16
    %18 = vadd.xlane.f32.xlu0 %v17
    %v19 = vpop.xlane.xlu0 %18
    %v20 = vmul.f32 %v19, 0.00390625
    %v21 = vsub.f32 %v15, %v20
    %v22 = vsub.f32 %v16, %v20
    %v23 = vmul.f32 %v21, %v21
    %v24 = vmul.f32 %v22, %v22
    %v25 = vadd.f32 %v23, %v24
    %26 = vadd.xlane.f32.xlu0 %v25
    %v27 = vpop.xlane.xlu0 %26
    %v28 = vmul.f32 %v27, 0.00390625
    %v29 = vadd.f32 %v28, 1e-05
    %v30 = vrsqrt.pop %v29
    %v31 = vld [vmem:[%s1] sm:$0xff]
    %v32 = vmul.f32 %v30, %v31
    %v33 = vld [vmem:[%s2] sm:$0xff]
    %v34 = vmul.f32 %v20, %v32
    %v35 = vsub.f32 %v33, %v34
    %37 = vset.pattern.permute.xlu0 0
    %38 = vperm.xlu0 %37, %v32
    %v39 = vpop.permute.xlu0 %38
    %v41 = vmul.f32 %v15, %v39
    %v42 = vmul.f32 %v16, %v39
    %44 = vset.pattern.permute.xlu0 0
    %45 = vperm.xlu0 %44, %v35
    %v46 = vpop.permute.xlu0 %45
    %v48 = vadd.f32 %v41, %v46
    %v49 = vadd.f32 %v42, %v46
    %50 = vst [vmem:[#allocation2] sm:$0xff] %v48
    %51 = vst [vmem:[#allocation2 + $0x8] sm:$0xff] %v49
    // Predicated region
    $region14: #{tpu_custom_call.1} parent=1 // pred_check
      _
    $region15: #{tpu_custom_call.1} parent=1 // pred_check_branch
      %53 = sbr.rel (0) target = $region17
    $region16: #{tpu_custom_call.1} parent=1 // pred_region
      %s55 = ssub.s32 256, 256
      %56 = vsyncadd [#allocation3], %s55
      %s58 = sshll.u32 [#allocation2], 4
      %s59 = int_to_ptr.vmem [resolvable:$true] %s58
      %61 = dma.vmem_to_hbm [thread:$0]  %s59, 256, %s3, [#allocation3]
    $region17: #{tpu_custom_call.1} parent=1 // pred_fallthru
      _
    // Predicated region
    $region18: #{tpu_custom_call.1} parent=1 // pred_check
      _
    $region19: #{tpu_custom_call.1} parent=1 // pred_check_branch
      %63 = sbr.rel (0) target = $region21
    $region20: #{tpu_custom_call.1} parent=1 // pred_region
      %64 = dma.done [#allocation3], 256
    $region21: #{tpu_custom_call.1} parent=1 // pred_fallthru
      _
    %65 = vsyncpa [#allocation3], 1

</llo_original>
